<compile_context>
chip_gen: v7x
topology: tpu7x:2x2x1
jax: 0.10.0
libtpu: 0.0.40
codegen_flags: <defaults>
</compile_context>

<pallas_src>
import math

import jax
import jax.numpy as jnp
from jax.experimental import pallas as pl
from jax.experimental.pallas import tpu as pltpu


# -----------------------------------------------------------------------------
# "Param" equivalents (small synthetic sizes consistent with the forward pass)
# -----------------------------------------------------------------------------
class Param:
    batch_size = 2
    max_room_num = 4
    max_obs_num = 8
    max_gate_num = 4
    obs_feat_in_num = 16
    obs_feat_out_num = 8
    gate_feat_in_num = 8
    gate_feat_out_num = 8
    # method='cat' => room_emb_size_in = O*obs_out + G*gate_out
    room_emb_size_in = max_obs_num * obs_feat_out_num + max_gate_num * gate_feat_out_num  # 96
    room_emb_size = 32


def _round_up(x, m):
    return ((x + m - 1) // m) * m


# -----------------------------------------------------------------------------
# Fused kernel: [obs|gate] block-diag Linear -> bias -> ReLU -> room Linear -> bias
# -----------------------------------------------------------------------------
def _room_embedding_kernel(x_ref, w_in_ref, b_in_ref, w_room_ref, b_room_ref, o_ref):
    # Block-diagonal weight applies the shared obs / gate Linears to every obs
    # and gate slot of each room in a single matmul; its output columns are
    # already in PyTorch's reshape+cat order.
    h = jnp.dot(x_ref[...], w_in_ref[...], preferred_element_type=jnp.float32)
    h = jnp.maximum(h + b_in_ref[...], 0.0)           # bias + ReLU (commutes w/ cat)
    out = jnp.dot(h.astype(w_room_ref.dtype), w_room_ref[...],
                  preferred_element_type=jnp.float32)
    o_ref[...] = out + b_room_ref[...]


# -----------------------------------------------------------------------------
# Parameter init (mirrors the PyTorch module's _init_weights / defaults)
# -----------------------------------------------------------------------------
def _xavier_uniform_with_gain(key, out_f, in_f):
    # xavier_uniform_ with gain = sqrt(2/(fan0+fan1)); the gain formula is
    # symmetric so the swapped fan naming in the original module is harmless.
    gain = math.sqrt(2.0 / (out_f + in_f))
    bound = gain * math.sqrt(6.0 / (in_f + out_f))
    return jax.random.uniform(key, (out_f, in_f), jnp.float32, -bound, bound)


def _default_linear_weight(key, out_f, in_f):
    bound = 1.0 / math.sqrt(in_f)
    return jax.random.uniform(key, (out_f, in_f), jnp.float32, -bound, bound)


def _default_linear_bias(key, out_f, in_f):
    bound = 1.0 / math.sqrt(in_f)
    return jax.random.uniform(key, (out_f,), jnp.float32, -bound, bound)


def init_params(key):
    """PyTorch-convention params: weight (out, in), bias (out,)."""
    ks = jax.random.split(key, 6)
    return {
        "w_obs": _xavier_uniform_with_gain(ks[0], Param.obs_feat_out_num, Param.obs_feat_in_num),
        "b_obs": _default_linear_bias(ks[1], Param.obs_feat_out_num, Param.obs_feat_in_num),
        "w_gate": _xavier_uniform_with_gain(ks[2], Param.gate_feat_out_num, Param.gate_feat_in_num),
        "b_gate": _default_linear_bias(ks[3], Param.gate_feat_out_num, Param.gate_feat_in_num),
        "w_room": _default_linear_weight(ks[4], Param.room_emb_size, Param.room_emb_size_in),
        "b_room": _default_linear_bias(ks[5], Param.room_emb_size, Param.room_emb_size_in),
    }


def prepare_kernel_params(params):
    """One-time layout prep: merge obs/gate into one block-diagonal bf16 weight."""
    O, G = Param.max_obs_num, Param.max_gate_num
    obs_in, gate_in = Param.obs_feat_in_num, Param.gate_feat_in_num
    obs_out, gate_out = Param.obs_feat_out_num, Param.gate_feat_out_num
    d_in = O * obs_in + G * gate_in
    d_hid = O * obs_out + G * gate_out          # == Param.room_emb_size_in

    # kron(I_O, Wo^T) applies the shared obs Linear to each of the O obs slots
    # in one matmul.  TODO(synk): kron inflates weight bytes/FLOPs by O (G);
    # switch to a dense per-item matmul + dot_general against a
    # (O, obs_out, room_out) room weight if obs_in/O ever grow large (v7x VMEM).
    w_obs_bd = jnp.kron(jnp.eye(O, dtype=jnp.float32), params["w_obs"].T)    # (O*obs_in, O*obs_out)
    w_gate_bd = jnp.kron(jnp.eye(G, dtype=jnp.float32), params["w_gate"].T)  # (G*gate_in, G*gate_out)
    w_in = jnp.zeros((d_in, d_hid), jnp.float32)
    w_in = w_in.at[:O * obs_in, :O * obs_out].set(w_obs_bd)
    w_in = w_in.at[O * obs_in:, O * obs_out:].set(w_gate_bd)

    b_in = jnp.concatenate([jnp.tile(params["b_obs"], O),
                            jnp.tile(params["b_gate"], G)]).reshape(1, d_hid)

    return {
        "w_in": w_in.astype(jnp.bfloat16),                     # (d_in, d_hid)  bf16
        "b_in": b_in,                                          # (1, d_hid)     f32
        "w_room": params["w_room"].T.astype(jnp.bfloat16),     # (d_hid, room_out) bf16
        "b_room": params["b_room"].reshape(1, -1),             # (1, room_out)  f32
    }


# -----------------------------------------------------------------------------
# RoomEmbedding.forward (method='cat') — single fused pallas_call
# -----------------------------------------------------------------------------
def room_embedding_forward(kparams, obs_info, gate_info, method="cat"):
    if method != "cat":
        # TODO(synk): 'avg' branch (mean over O/G; different room_emb_size_in)
        # and _LSTM_emb are not implemented.
        raise NameError(f"there is no method called {method}")

    B, R, O, obs_in = obs_info.shape
    _, _, G, gate_in = gate_info.shape
    rows = B * R
    d_in = O * obs_in + G * gate_in

    # Wrapper-side contiguous flatten + concat (cheap metadata/copy), single
    # bf16 cast of the activations.
    x = jnp.concatenate(
        [obs_info.reshape(rows, O * obs_in), gate_info.reshape(rows, G * gate_in)],
        axis=1,
    ).astype(jnp.bfloat16)

    w_in, b_in = kparams["w_in"], kparams["b_in"]
    w_room, b_room = kparams["w_room"], kparams["b_room"]
    d_hid = w_in.shape[1]
    room_out = w_room.shape[1]

    # --- row tile from VMEM budget -------------------------------------------
    # Per row (double-buffered): bf16 x (2*d_in*2 B) + f32 out (2*room_out*4 B)
    # ≈ 0.9 KB, so a few thousand rows per tile fit every generation's scoped
    # VMEM (vmem_limit_bytes raised explicitly below for v5e).
    if rows <= 2048:
        bm = rows                                    # single step; block == full extent
        grid = (1,)
    else:
        # At least 2 (even) "parallel" steps so both v7x TensorCores stay busy.
        bm = min(4096, _round_up(pl.cdiv(rows, 2), 8))
        steps = pl.cdiv(rows, bm)
        if steps > 1 and steps % 2 == 1:
            bm = _round_up(pl.cdiv(rows, steps + 1), 8)
        grid = (pl.cdiv(rows, bm),)

    # Only structurally non-zero FLOPs (not the kron-padded dense FLOPs).
    flops = 2 * rows * (O * obs_in * Param.obs_feat_out_num
                        + G * gate_in * Param.gate_feat_out_num
                        + d_hid * room_out)
    bytes_accessed = (x.size * 2 + w_in.size * 2 + w_room.size * 2
                      + b_in.size * 4 + b_room.size * 4 + rows * room_out * 4)

    out = pl.pallas_call(
        _room_embedding_kernel,
        out_shape=jax.ShapeDtypeStruct((rows, room_out), jnp.float32),
        grid=grid,
        in_specs=[
            pl.BlockSpec((bm, d_in), lambda i: (i, 0)),      # row tile of activations
            pl.BlockSpec(w_in.shape, lambda i: (0, 0)),      # resident weights/biases
            pl.BlockSpec(b_in.shape, lambda i: (0, 0)),
            pl.BlockSpec(w_room.shape, lambda i: (0, 0)),
            pl.BlockSpec(b_room.shape, lambda i: (0, 0)),
        ],
        out_specs=pl.BlockSpec((bm, room_out), lambda i: (i, 0)),
        compiler_params=pltpu.CompilerParams(
            dimension_semantics=("parallel",),
            vmem_limit_bytes=32 * 1024 * 1024,
        ),
        cost_estimate=pl.CostEstimate(flops=flops, transcendentals=0,
                                      bytes_accessed=bytes_accessed),
    )(x, w_in, b_in, w_room, b_room)

    return out.reshape(B, R, room_out)


# -----------------------------------------------------------------------------
# Pure-JAX reference (mirrors the PyTorch forward exactly, f32)
# -----------------------------------------------------------------------------
def reference_forward(params, obs_info, gate_info):
    B, R, O, _ = obs_info.shape
    _, _, G, _ = gate_info.shape
    obs_emb = obs_info @ params["w_obs"].T + params["b_obs"]
    gate_emb = gate_info @ params["w_gate"].T + params["b_gate"]
    cat_obs = obs_emb.reshape(B, R, O * Param.obs_feat_out_num)
    cat_gate = gate_emb.reshape(B, R, G * Param.gate_feat_out_num)
    room_in = jnp.concatenate([cat_obs, cat_gate], axis=2)
    return jnp.maximum(room_in, 0.0) @ params["w_room"].T + params["b_room"]


if __name__ == "__main__":
    key = jax.random.PRNGKey(0)
    k_params, k_obs, k_gate = jax.random.split(key, 3)

    params = init_params(k_params)
    kparams = prepare_kernel_params(params)   # one-time layout prep; not per-forward

    obs_info = jax.random.normal(
        k_obs,
        (Param.batch_size, Param.max_room_num, Param.max_obs_num, Param.obs_feat_in_num),
        jnp.float32,
    )
    gate_info = jax.random.normal(
        k_gate,
        (Param.batch_size, Param.max_room_num, Param.max_gate_num, Param.gate_feat_in_num),
        jnp.float32,
    )

    out = room_embedding_forward(kparams, obs_info, gate_info, method="cat")
    out = jax.block_until_ready(out)

    assert out.shape == (Param.batch_size, Param.max_room_num, Param.room_emb_size)

    ref = reference_forward(params, obs_info, gate_info)
    # bf16 matmul operands (f32 accumulation) -> relaxed parity tolerance.
    assert jnp.allclose(out, ref, atol=3e-2, rtol=3e-2), "mismatch vs reference"

    print("KERNEL_OK")
</pallas_src>

<mosaic_0001>
module attributes {stable_mosaic.version = 11 : i64} {
  func.func @_room_embedding_kernel(%arg0: i32, %arg1: memref<8x160xbf16, #tpu.memory_space<vmem>>, %arg2: memref<160x96xbf16, #tpu.memory_space<vmem>>, %arg3: memref<1x96xf32, #tpu.memory_space<vmem>>, %arg4: memref<96x32xbf16, #tpu.memory_space<vmem>>, %arg5: memref<1x32xf32, #tpu.memory_space<vmem>>, %arg6: memref<8x32xf32, #tpu.memory_space<vmem>>) attributes {dimension_semantics = [#tpu.dimension_semantics<parallel>], iteration_bounds = array<i64: 1>, scalar_prefetch = 0 : i64, scratch_operands = 0 : i64, tpu.core_type = #tpu.core_type<tc>, window_params = [{transform_indices = @transform_0, window_bounds = array<i64: 8, 160>}, {pipeline_mode = #tpu.pipeline_mode<synchronous>, transform_indices = @transform_1, window_bounds = array<i64: 160, 96>}, {pipeline_mode = #tpu.pipeline_mode<synchronous>, transform_indices = @transform_2, window_bounds = array<i64: 1, 96>}, {pipeline_mode = #tpu.pipeline_mode<synchronous>, transform_indices = @transform_3, window_bounds = array<i64: 96, 32>}, {pipeline_mode = #tpu.pipeline_mode<synchronous>, transform_indices = @transform_4, window_bounds = array<i64: 1, 32>}, {transform_indices = @transform_5, window_bounds = array<i64: 8, 32>}]} {
    %c0 = arith.constant 0 : index
    %c0_0 = arith.constant 0 : index
    %0 = vector.load %arg1[%c0, %c0_0] : memref<8x160xbf16, #tpu.memory_space<vmem>>, vector<8x160xbf16>
    %c0_1 = arith.constant 0 : index
    %c0_2 = arith.constant 0 : index
    %1 = vector.load %arg2[%c0_1, %c0_2] : memref<160x96xbf16, #tpu.memory_space<vmem>>, vector<160x96xbf16>
    %cst = arith.constant dense<0.000000e+00> : vector<8x96xf32>
    %2 = tpu.matmul %0, %1, %cst {dimension_numbers = #tpu.dot_dimension_numbers<[1], [0], [0], [1], [0, 0, 1, 1], [], []>} : vector<8x160xbf16>, vector<160x96xbf16>, vector<8x96xf32> -> vector<8x96xf32>
    %c0_3 = arith.constant 0 : index
    %c0_4 = arith.constant 0 : index
    %3 = vector.load %arg3[%c0_3, %c0_4] : memref<1x96xf32, #tpu.memory_space<vmem>>, vector<1x96xf32>
    %4 = vector.broadcast %3 : vector<1x96xf32> to vector<8x96xf32>
    %5 = arith.addf %2, %4 : vector<8x96xf32>
    %cst_5 = arith.constant 0.000000e+00 : f32
    %6 = vector.broadcast %cst_5 : f32 to vector<8x96xf32>
    %7 = arith.maximumf %5, %6 : vector<8x96xf32>
    %8 = arith.truncf %7 : vector<8x96xf32> to vector<8x96xbf16>
    %c0_6 = arith.constant 0 : index
    %c0_7 = arith.constant 0 : index
    %9 = vector.load %arg4[%c0_6, %c0_7] : memref<96x32xbf16, #tpu.memory_space<vmem>>, vector<96x32xbf16>
    %cst_8 = arith.constant dense<0.000000e+00> : vector<8x32xf32>
    %10 = tpu.matmul %8, %9, %cst_8 {dimension_numbers = #tpu.dot_dimension_numbers<[1], [0], [0], [1], [0, 0, 1, 1], [], []>} : vector<8x96xbf16>, vector<96x32xbf16>, vector<8x32xf32> -> vector<8x32xf32>
    %c0_9 = arith.constant 0 : index
    %c0_10 = arith.constant 0 : index
    %11 = vector.load %arg5[%c0_9, %c0_10] : memref<1x32xf32, #tpu.memory_space<vmem>>, vector<1x32xf32>
    %12 = vector.broadcast %11 : vector<1x32xf32> to vector<8x32xf32>
    %13 = arith.addf %10, %12 : vector<8x32xf32>
    %c0_11 = arith.constant 0 : index
    %c0_12 = arith.constant 0 : index
    %14 = vector.load %arg6[%c0_11, %c0_12] : memref<8x32xf32, #tpu.memory_space<vmem>>, vector<8x32xf32>
    tpu.vector_store %arg6[%c0_11, %c0_12], %13 {strides = array<i32>} : memref<8x32xf32, #tpu.memory_space<vmem>>, vector<8x32xf32>,
    return
  }
  func.func @transform_0(%arg0: i32) -> (i32, i32) {
    %c0_i32 = arith.constant 0 : i32
    %c0_i32_0 = arith.constant 0 : i32
    return %arg0, %c0_i32 : i32, i32
  }
  func.func @transform_1(%arg0: i32) -> (i32, i32) {
    %c0_i32 = arith.constant 0 : i32
    %c0_i32_0 = arith.constant 0 : i32
    %c0_i32_1 = arith.constant 0 : i32
    return %c0_i32, %c0_i32_0 : i32, i32
  }
  func.func @transform_2(%arg0: i32) -> (i32, i32) {
    %c0_i32 = arith.constant 0 : i32
    %c0_i32_0 = arith.constant 0 : i32
    %c0_i32_1 = arith.constant 0 : i32
    return %c0_i32, %c0_i32_0 : i32, i32
  }
  func.func @transform_3(%arg0: i32) -> (i32, i32) {
    %c0_i32 = arith.constant 0 : i32
    %c0_i32_0 = arith.constant 0 : i32
    %c0_i32_1 = arith.constant 0 : i32
    return %c0_i32, %c0_i32_0 : i32, i32
  }
  func.func @transform_4(%arg0: i32) -> (i32, i32) {
    %c0_i32 = arith.constant 0 : i32
    %c0_i32_0 = arith.constant 0 : i32
    %c0_i32_1 = arith.constant 0 : i32
    return %c0_i32, %c0_i32_0 : i32, i32
  }
  func.func @transform_5(%arg0: i32) -> (i32, i32) {
    %c0_i32 = arith.constant 0 : i32
    %c0_i32_0 = arith.constant 0 : i32
    return %arg0, %c0_i32 : i32, i32
  }
}

</mosaic_0001>

<llo_original>
// kernel: tpu_custom_call.1
$region0: #{tpu_custom_call.1}
  #allocation0 [shape = 'u32[]', space=smem, size = 0x4, offset = 0x4, fixed_abs, tag = 'smem constant byte address 0x4 - core index']
  #allocation1 [shape = 'u32[144,128]{1,0:T(1,128)}', space=vmem, size = 0x12000, scoped, tag = 'internal scratch']
  %s0 = inlined_call_operand.vmem [shape: bf16[8,160], index: 0, kind: input, shape index: {}]
  %s1 = inlined_call_operand.hbm [shape: bf16[160,96], index: 1, kind: input, shape index: {}]
  %s2 = inlined_call_operand.vmem [shape: f32[1,96], index: 2, kind: input, shape index: {}]
  %s3 = inlined_call_operand.vmem [shape: bf16[96,32], index: 3, kind: input, shape index: {}]
  %s4 = inlined_call_operand.vmem [shape: f32[1,32], index: 4, kind: input, shape index: {}]
  %s5 = inlined_call_operand.hbm [shape: f32[8,32], index: 5, kind: output, shape index: {}]
  %s6 = sld [smem:[#allocation0]]
  $region34: #{tpu_custom_call.1} parent=0
    _
  %s8 = ssub.s32 1, %s6
  %s9 = scalar_select 0, %s8, %s6
  $region1: #{tpu_custom_call.1} parent=0
    #allocation2 [shape = 'u8[40960]{0}', space=vmem, size = 0xa000, scoped, tag = 'input window, operand 1, single buffered']
    #allocation3 [shape = 's32[1]{0}', space=sflag, size = 0x4, scoped, tag = 'scoped memory for tpu_custom_call.1']
    #allocation4 [shape = 's32[1]{0}', space=sflag, size = 0x4, scoped, tag = 'scoped memory for tpu_custom_call.1']
    #allocation5 [shape = 'u8[4096]{0}', space=vmem, size = 0x1000, scoped, tag = 'output window, operand 0, single buffered']
    %10 = vsyncpa [#allocation3], 0
    %11 = vsyncpa [#allocation4], 0
    // Predicated region
    $region2: #{tpu_custom_call.1} parent=1 // pred_check
      _
    $region3: #{tpu_custom_call.1} parent=1 // pred_check_branch
      %13 = sbr.rel (0) target = $region5
    $region4: #{tpu_custom_call.1} parent=1 // pred_region
      _
    $region5: #{tpu_custom_call.1} parent=1 // pred_fallthru
      _
    // Predicated region
    $region6: #{tpu_custom_call.1} parent=1 // pred_check
      _
    $region7: #{tpu_custom_call.1} parent=1 // pred_check_branch
      %15 = sbr.rel (0) target = $region9
    $region8: #{tpu_custom_call.1} parent=1 // pred_region
      %s17 = ssub.s32 1280, 1280
      %18 = vsyncadd [#allocation3], %s17
      %s19 = sshll.u32 [#allocation2], 4
      %s20 = int_to_ptr.vmem [resolvable:$true] %s19
      %25 = dma.hbm_to_vmem [thread:$0]  %s1, 1280, %s20, [#allocation3], 64, 64, 4
    $region9: #{tpu_custom_call.1} parent=1 // pred_fallthru
      _
    // Predicated region
    $region10: #{tpu_custom_call.1} parent=1 // pred_check
      _
    $region11: #{tpu_custom_call.1} parent=1 // pred_check_branch
      %27 = sbr.rel (0) target = $region13
    $region12: #{tpu_custom_call.1} parent=1 // pred_region
      _
    $region13: #{tpu_custom_call.1} parent=1 // pred_fallthru
      _
    // Predicated region
    $region14: #{tpu_custom_call.1} parent=1 // pred_check
      _
    $region15: #{tpu_custom_call.1} parent=1 // pred_check_branch
      %29 = sbr.rel (0) target = $region17
    $region16: #{tpu_custom_call.1} parent=1 // pred_region
      _
    $region17: #{tpu_custom_call.1} parent=1 // pred_fallthru
      _
    // Predicated region
    $region18: #{tpu_custom_call.1} parent=1 // pred_check
      _
    $region19: #{tpu_custom_call.1} parent=1 // pred_check_branch
      %31 = sbr.rel (0) target = $region21
    $region20: #{tpu_custom_call.1} parent=1 // pred_region
      _
    $region21: #{tpu_custom_call.1} parent=1 // pred_fallthru
      _
    // Predicated region
    $region22: #{tpu_custom_call.1} parent=1 // pred_check
      _
    $region23: #{tpu_custom_call.1} parent=1 // pred_check_branch
      %33 = sbr.rel (0) target = $region25
    $region24: #{tpu_custom_call.1} parent=1 // pred_region
      %34 = dma.done [#allocation3], 1280
    $region25: #{tpu_custom_call.1} parent=1 // pred_fallthru
      _
    %v36 = vld [vmem:[%s0] sm:$0xff]
    %v37 = vld [vmem:[#allocation2] sm:$0xf]
    %v38 = vld [vmem:[#allocation2 + $0x4] sm:$0xf]
    %v39 = vld [vmem:[#allocation2 + $0x8] sm:$0xf]
    %v40 = vld [vmem:[#allocation2 + $0xc] sm:$0xf]
    %v41 = vld [vmem:[#allocation2 + $0x10] sm:$0xf]
    %v42 = vld [vmem:[#allocation2 + $0x14] sm:$0xf]
    %v43 = vld [vmem:[#allocation2 + $0x18] sm:$0xf]
    %v44 = vld [vmem:[#allocation2 + $0x1c] sm:$0xf]
    %v45 = vld [vmem:[#allocation2 + $0x20] sm:$0xf]
    %v46 = vld [vmem:[#allocation2 + $0x24] sm:$0xf]
    %v47 = vld [vmem:[#allocation2 + $0x28] sm:$0xf]
    %v48 = vld [vmem:[#allocation2 + $0x2c] sm:$0xf]
    %v49 = vld [vmem:[#allocation2 + $0x30] sm:$0xf]
    %v50 = vld [vmem:[#allocation2 + $0x34] sm:$0xf]
    %v51 = vld [vmem:[#allocation2 + $0x38] sm:$0xf]
    %v52 = vld [vmem:[#allocation2 + $0x3c] sm:$0xf]
    %v53 = vld [vmem:[#allocation2 + $0x40] sm:$0xf]
    %v54 = vld [vmem:[#allocation2 + $0x44] sm:$0xf]
    %v55 = vld [vmem:[#allocation2 + $0x48] sm:$0xf]
    %v56 = vld [vmem:[#allocation2 + $0x4c] sm:$0xf]
    %v57 = vld [vmem:[%s2] sm:$0x1]
    %v59 = vlaneseq
    %v60 = vshrl.u32 %v59, 7
    %v61 = vsub.s32 0, %v60
    %v62 = vrot.slane %v57, %v61
    %v65 = vunpack.c.l.b16 %v36
    %v66 = vunpack.c.h.b16 %v36
    %v67 = vpack.c.b16 %v65, %v65
    %v68 = vpack.c.b16 %v66, %v66
    %v90 = vunpack.c.l.b16 %v37
    %v91 = vunpack.c.l.b16 %v38
    %v92 = vunpack.c.l.b16 %v39
    %v93 = vunpack.c.l.b16 %v40
    %v94 = vunpack.c.l.b16 %v41
    %v95 = vunpack.c.l.b16 %v42
    %v96 = vunpack.c.l.b16 %v43
    %v97 = vunpack.c.l.b16 %v44
    %v98 = vunpack.c.l.b16 %v45
    %v99 = vunpack.c.l.b16 %v46
    %v100 = vunpack.c.l.b16 %v47
    %v101 = vunpack.c.l.b16 %v48
    %v102 = vunpack.c.l.b16 %v49
    %v103 = vunpack.c.l.b16 %v50
    %v104 = vunpack.c.l.b16 %v51
    %v105 = vunpack.c.l.b16 %v52
    %v106 = vunpack.c.l.b16 %v53
    %v107 = vunpack.c.l.b16 %v54
    %v108 = vunpack.c.l.b16 %v55
    %v109 = vunpack.c.l.b16 %v56
    %v110 = vpack.c.b16 %v91, %v90
    %v111 = vpack.c.b16 %v93, %v92
    %v112 = vpack.c.b16 %v95, %v94
    %v113 = vpack.c.b16 %v97, %v96
    %v114 = vpack.c.b16 %v99, %v98
    %v115 = vpack.c.b16 %v101, %v100
    %v116 = vpack.c.b16 %v103, %v102
    %v117 = vpack.c.b16 %v105, %v104
    %v118 = vpack.c.b16 %v107, %v106
    %v119 = vpack.c.b16 %v109, %v108
    %vm130 = vcmask 261120
    %v132 = vsel %vm130, %v68, 0
    %134 = vmatprep.subr.bf16.mxu0 0
    %135 = vmatpush1.bf16.msra.mxu0 %v110
    %136 = vmatprep.subr.bf16.mxu0 0
    %137 = vmatpush1.bf16.msra.mxu0 %v111
    %138 = vmatprep.subr.bf16.mxu0 0
    %139 = vmatpush1.bf16.msra.mxu0 %v112
    %140 = vmatprep.subr.bf16.mxu0 0
    %141 = vmatpush1.bf16.msra.mxu0 %v113
    %142 = vmatprep.subr.bf16.mxu0 0
    %143 = vmatpush1.bf16.msra.mxu0 %v114
    %144 = vmatprep.subr.bf16.mxu0 0
    %145 = vmatpush1.bf16.msra.mxu0 %v115
    %146 = vmatprep.subr.bf16.mxu0 0
    %147 = vmatpush1.bf16.msra.mxu0 %v116
    %148 = vmatprep.subr.bf16.mxu0 0
    %149 = vmatpush1.bf16.msra.mxu0 %v117
    %150 = vmatprep.subr.bf16.mxu0 0
    %151 = vmatpush1.bf16.msra.mxu0 %v118
    %152 = vmatprep.subr.bf16.mxu0 0
    %153 = vmatpush1.bf16.msra.mxu0 %v119
    %154 = vmatprep.subr.bf16.mxu0 0
    %155 = vmatpush1.bf16.msra.mxu0 0
    %156 = vmatprep.subr.bf16.mxu0 0
    %157 = vmatpush1.bf16.msra.mxu0 0
    %158 = vmatprep.subr.bf16.mxu0 0
    %159 = vmatpush1.bf16.msra.mxu0 0
    %160 = vmatprep.subr.bf16.mxu0 0
    %161 = vmatpush1.bf16.msra.mxu0 0
    %162 = vmatprep.subr.bf16.mxu0 0
    %163 = vmatpush1.bf16.msra.mxu0 0
    %164 = vmatprep.subr.bf16.mxu0 0
    %165 = vmatpush1.bf16.msra.mxu0 0
    %166 = vmatprep.mubr.bf16.mxu0 %v132
    %167 = vmatmul.mubr.bf16.gmra.mrb[0].mxu0 %v67
    %v168 = vpop.f32.mrb[0].mxu0
    %v169 = vadd.f32 %v62, %v168
    %v170 = vpop.f32.mrb[0].mxu0
    %v171 = vpop.f32.mrb[0].mxu0
    %v172 = vpop.f32.mrb[0].mxu0
    %173 = vdwg.mxu0
    %v174 = vmax.f32 %v169, 0.0
    %v175 = vpack.c.bf16 %v174, %v174
    %v176 = vld [vmem:[%s3] sm:$0xf]
    %v177 = vld [vmem:[%s3 + $0x4] sm:$0xf]
    %v178 = vld [vmem:[%s3 + $0x8] sm:$0xf]
    %v179 = vld [vmem:[%s3 + $0xc] sm:$0xf]
    %v180 = vld [vmem:[%s3 + $0x10] sm:$0xf]
    %v181 = vld [vmem:[%s3 + $0x14] sm:$0xf]
    %v182 = vld [vmem:[%s3 + $0x18] sm:$0xf]
    %v183 = vld [vmem:[%s3 + $0x1c] sm:$0xf]
    %v184 = vld [vmem:[%s3 + $0x20] sm:$0xf]
    %v185 = vld [vmem:[%s3 + $0x24] sm:$0xf]
    %v186 = vld [vmem:[%s3 + $0x28] sm:$0xf]
    %v187 = vld [vmem:[%s3 + $0x2c] sm:$0xf]
    %v188 = vld [vmem:[%s4] sm:$0x1]
    %v190 = vlaneseq
    %v191 = vshrl.u32 %v190, 7
    %v192 = vsub.s32 0, %v191
    %v193 = vrot.slane %v188, %v192
    %v207 = vunpack.c.l.b16 %v176
    %v208 = vunpack.c.l.b16 %v177
    %v209 = vunpack.c.l.b16 %v178
    %v210 = vunpack.c.l.b16 %v179
    %v211 = vunpack.c.l.b16 %v180
    %v212 = vunpack.c.l.b16 %v181
    %v213 = vunpack.c.l.b16 %v182
    %v214 = vunpack.c.l.b16 %v183
    %v215 = vunpack.c.l.b16 %v184
    %v216 = vunpack.c.l.b16 %v185
    %v217 = vunpack.c.l.b16 %v186
    %v218 = vunpack.c.l.b16 %v187
    %v219 = vpack.c.b16 %v208, %v207
    %v220 = vpack.c.b16 %v210, %v209
    %v221 = vpack.c.b16 %v212, %v211
    %v222 = vpack.c.b16 %v214, %v213
    %v223 = vpack.c.b16 %v216, %v215
    %v224 = vpack.c.b16 %v218, %v217
    %vm231 = vcmask 785408
    %v233 = vsel %vm231, %v175, 0
    %235 = vmatprep.subr.bf16.mxu0 0
    %236 = vmatpush1.bf16.msra.mxu0 %v219
    %237 = vmatprep.subr.bf16.mxu0 0
    %238 = vmatpush1.bf16.msra.mxu0 %v220
    %239 = vmatprep.subr.bf16.mxu0 0
    %240 = vmatpush1.bf16.msra.mxu0 %v221
    %241 = vmatprep.subr.bf16.mxu0 0
    %242 = vmatpush1.bf16.msra.mxu0 %v222
    %243 = vmatprep.subr.bf16.mxu0 0
    %244 = vmatpush1.bf16.msra.mxu0 %v223
    %245 = vmatprep.subr.bf16.mxu0 0
    %246 = vmatpush1.bf16.msra.mxu0 %v224
    %247 = vmatprep.subr.bf16.mxu0 0
    %248 = vmatpush1.bf16.msra.mxu0 0
    %249 = vmatprep.subr.bf16.mxu0 0
    %250 = vmatpush1.bf16.msra.mxu0 0
    %251 = vmatprep.subr.bf16.mxu0 0
    %252 = vmatpush1.bf16.msra.mxu0 0
    %253 = vmatprep.subr.bf16.mxu0 0
    %254 = vmatpush1.bf16.msra.mxu0 0
    %255 = vmatprep.subr.bf16.mxu0 0
    %256 = vmatpush1.bf16.msra.mxu0 0
    %257 = vmatprep.subr.bf16.mxu0 0
    %258 = vmatpush1.bf16.msra.mxu0 0
    %259 = vmatprep.subr.bf16.mxu0 0
    %260 = vmatpush1.bf16.msra.mxu0 0
    %261 = vmatprep.subr.bf16.mxu0 0
    %262 = vmatpush1.bf16.msra.mxu0 0
    %263 = vmatprep.subr.bf16.mxu0 0
    %264 = vmatpush1.bf16.msra.mxu0 0
    %265 = vmatprep.subr.bf16.mxu0 0
    %266 = vmatpush1.bf16.msra.mxu0 0
    %267 = vmatprep.mubr.bf16.mxu0 0
    %268 = vmatmul.mubr.bf16.gmra.mrb[0].mxu0 %v233
    %v269 = vpop.f32.mrb[0].mxu0
    %v270 = vadd.f32 %v193, %v269
    %v271 = vpop.f32.mrb[0].mxu0
    %v272 = vpop.f32.mrb[0].mxu0
    %v273 = vpop.f32.mrb[0].mxu0
    %274 = vdwg.mxu0
    %275 = vst.msk [vmem:[#allocation5] sm:$0xff] %vm130, %v270
    // Predicated region
    $region26: #{tpu_custom_call.1} parent=1 // pred_check
      _
    $region27: #{tpu_custom_call.1} parent=1 // pred_check_branch
      %277 = sbr.rel (0) target = $region29
    $region28: #{tpu_custom_call.1} parent=1 // pred_region
      %s279 = ssub.s32 128, 128
      %280 = vsyncadd [#allocation4], %s279
      %s282 = sshll.u32 [#allocation5], 4
      %s283 = int_to_ptr.vmem [resolvable:$true] %s282
      %285 = dma.vmem_to_hbm [thread:$0]  %s283, 128, %s5, [#allocation4]
    $region29: #{tpu_custom_call.1} parent=1 // pred_fallthru
      _
    // Predicated region
    $region30: #{tpu_custom_call.1} parent=1 // pred_check
      _
    $region31: #{tpu_custom_call.1} parent=1 // pred_check_branch
      %287 = sbr.rel (0) target = $region33
    $region32: #{tpu_custom_call.1} parent=1 // pred_region
      %288 = dma.done [#allocation4], 128
    $region33: #{tpu_custom_call.1} parent=1 // pred_fallthru
      _
    %289 = vsyncpa [#allocation3], 1
    %290 = vsyncpa [#allocation4], 1

</llo_original>
